<compile_context>
chip_gen: v7x
topology: tpu7x:2x2x1
jax: 0.10.0
libtpu: 0.0.40
codegen_flags: <defaults>
</compile_context>

<pallas_src>
import jax
import jax.numpy as jnp
from jax.experimental import pallas as pl
from jax.experimental.pallas import tpu as pltpu


def _round_up(x: int, m: int) -> int:
    return (x + m - 1) // m * m


def mlp_kernel(x_ref, w1_ref, b1_ref, w2_ref, b2_ref, o_ref):
    # lin1: (TN, in_size) @ (in_size, H_pad) + (1, H_pad)
    h = jnp.dot(x_ref[...], w1_ref[...], preferred_element_type=jnp.float32)
    # ReLU (VPU)
    h = jnp.maximum(h + b1_ref[...], 0.0)
    # lin2: (TN, H_pad) @ (H_pad, out_size) + (1, out_size)
    out = jnp.dot(h, w2_ref[...], preferred_element_type=jnp.float32) + b2_ref[...]
    # Sigmoid: exp on the EUP; exact reciprocal keeps the 1e-5 tolerance.
    o_ref[...] = pl.reciprocal(1.0 + jnp.exp(-out), approx=False).astype(o_ref.dtype)


@jax.jit
def neuralnet_forward(x, w1, b1, w2, b2):
    """x: (N, in_size); w1: (in_size, H); b1: (1, H); w2: (H, out); b2: (1, out)."""
    N, in_size = x.shape
    H = w1.shape[1]
    out_size = w2.shape[1]

    # Hidden dim padded to a lane-dense 128 (padded lanes are exactly 0 through
    # bias + ReLU, and W2's padded rows are 0, so results are unchanged).
    H_pad = _round_up(H, 128)

    # Row tile: multiple of 8, capped at 1024, sized ~N/2 so the grid has >= 2 steps
    # (keeps both v7x TensorCores busy for mid-size N). No row padding of x: Pallas
    # masks the ragged last block's stores and rows are independent.
    TN = min(1024, _round_up(max(1, -(-N // 2)), 8))
    grid = (pl.cdiv(N, TN),)

    w1_p = jnp.pad(w1, ((0, 0), (0, H_pad - H)))
    b1_p = jnp.pad(b1, ((0, 0), (0, H_pad - H)))
    w2_p = jnp.pad(w2, ((0, H_pad - H), (0, 0)))

    flops = 2 * N * (in_size * H_pad + H_pad * out_size)
    bytes_accessed = 4 * (
        N * in_size + N * out_size            # streamed x in, y out
        + in_size * H_pad + H_pad             # resident W1, b1
        + H_pad * out_size + out_size         # resident W2, b2
    )

    y = pl.pallas_call(
        mlp_kernel,
        out_shape=jax.ShapeDtypeStruct((N, out_size), jnp.float32),
        grid_spec=pltpu.PrefetchScalarGridSpec(
            num_scalar_prefetch=0,
            grid=grid,
            in_specs=[
                # x streams row tiles; weights/biases stay on block (0, 0) (VMEM-resident).
                pl.BlockSpec((TN, in_size), lambda i: (i, 0)),
                pl.BlockSpec((in_size, H_pad), lambda i: (0, 0)),
                pl.BlockSpec((1, H_pad), lambda i: (0, 0)),
                pl.BlockSpec((H_pad, out_size), lambda i: (0, 0)),
                pl.BlockSpec((1, out_size), lambda i: (0, 0)),
            ],
            # Output is exactly (N, out_size): no padded columns, no post-call slice.
            out_specs=pl.BlockSpec((TN, out_size), lambda i: (i, 0)),
        ),
        compiler_params=pltpu.CompilerParams(
            dimension_semantics=("parallel",),
        ),
        cost_estimate=pl.CostEstimate(
            flops=int(flops),
            transcendentals=int(N * out_size),
            bytes_accessed=int(bytes_accessed),
        ),
    )(x, w1_p, b1_p, w2_p, b2)

    return y


def init_params(key, in_size, hidden_size, out_size):
    """Deterministic init mimicking nn.Linear's U(-1/sqrt(fan_in), 1/sqrt(fan_in))."""
    k1, k2, k3, k4 = jax.random.split(key, 4)
    bound1 = 1.0 / jnp.sqrt(in_size)
    bound2 = 1.0 / jnp.sqrt(hidden_size)
    w1 = jax.random.uniform(k1, (in_size, hidden_size), jnp.float32, -bound1, bound1)
    b1 = jax.random.uniform(k2, (1, hidden_size), jnp.float32, -bound1, bound1)
    w2 = jax.random.uniform(k3, (hidden_size, out_size), jnp.float32, -bound2, bound2)
    b2 = jax.random.uniform(k4, (1, out_size), jnp.float32, -bound2, bound2)
    return w1, b1, w2, b2


if __name__ == "__main__":
    # NeuralNet spec: in_size -> 32 -> out_size. Small deterministic example.
    N, in_size, hidden_size, out_size = 8, 64, 32, 4

    key = jax.random.PRNGKey(0)
    kx, kp = jax.random.split(key)
    x = jax.random.normal(kx, (N, in_size), jnp.float32)
    w1, b1, w2, b2 = init_params(kp, in_size, hidden_size, out_size)

    y = neuralnet_forward(x, w1, b1, w2, b2)
    y = jax.block_until_ready(y)

    # Pure-JAX reference check (same math as the PyTorch per-row loop).
    h_ref = jnp.maximum(x @ w1 + b1, 0.0)
    y_ref = jax.nn.sigmoid(h_ref @ w2 + b2)
    assert y.shape == (N, out_size)
    assert jnp.allclose(y, y_ref, atol=1e-5, rtol=1e-5)

    # Larger batch exercises the multi-block + ragged-last-block path (N % TN != 0).
    N_big = 1000
    x_big = jax.random.normal(jax.random.PRNGKey(1), (N_big, in_size), jnp.float32)
    y_big = jax.block_until_ready(neuralnet_forward(x_big, w1, b1, w2, b2))
    y_big_ref = jax.nn.sigmoid(jnp.maximum(x_big @ w1 + b1, 0.0) @ w2 + b2)
    assert y_big.shape == (N_big, out_size)
    assert jnp.allclose(y_big, y_big_ref, atol=1e-5, rtol=1e-5)

    print("KERNEL_OK")
</pallas_src>

<mosaic_0001>
module attributes {stable_mosaic.version = 11 : i64} {
  func.func @mlp_kernel(%arg0: i32, %arg1: memref<8x64xf32, #tpu.memory_space<vmem>>, %arg2: memref<64x128xf32, #tpu.memory_space<vmem>>, %arg3: memref<1x128xf32, #tpu.memory_space<vmem>>, %arg4: memref<128x4xf32, #tpu.memory_space<vmem>>, %arg5: memref<1x4xf32, #tpu.memory_space<vmem>>, %arg6: memref<8x4xf32, #tpu.memory_space<vmem>>) attributes {dimension_semantics = [#tpu.dimension_semantics<parallel>], iteration_bounds = array<i64: 1>, scalar_prefetch = 0 : i64, scratch_operands = 0 : i64, tpu.core_type = #tpu.core_type<tc>, window_params = [{transform_indices = @transform_0, window_bounds = array<i64: 8, 64>}, {pipeline_mode = #tpu.pipeline_mode<synchronous>, transform_indices = @transform_1, window_bounds = array<i64: 64, 128>}, {pipeline_mode = #tpu.pipeline_mode<synchronous>, transform_indices = @transform_2, window_bounds = array<i64: 1, 128>}, {pipeline_mode = #tpu.pipeline_mode<synchronous>, transform_indices = @transform_3, window_bounds = array<i64: 128, 4>}, {pipeline_mode = #tpu.pipeline_mode<synchronous>, transform_indices = @transform_4, window_bounds = array<i64: 1, 4>}, {transform_indices = @transform_5, window_bounds = array<i64: 8, 4>}]} {
    %c0 = arith.constant 0 : index
    %c0_0 = arith.constant 0 : index
    %0 = vector.load %arg1[%c0, %c0_0] : memref<8x64xf32, #tpu.memory_space<vmem>>, vector<8x64xf32>
    %c0_1 = arith.constant 0 : index
    %c0_2 = arith.constant 0 : index
    %1 = vector.load %arg2[%c0_1, %c0_2] : memref<64x128xf32, #tpu.memory_space<vmem>>, vector<64x128xf32>
    %cst = arith.constant dense<0.000000e+00> : vector<8x128xf32>
    %2 = tpu.matmul %0, %1, %cst {dimension_numbers = #tpu.dot_dimension_numbers<[1], [0], [0], [1], [0, 0, 1, 1], [], []>} : vector<8x64xf32>, vector<64x128xf32>, vector<8x128xf32> -> vector<8x128xf32>
    %c0_3 = arith.constant 0 : index
    %c0_4 = arith.constant 0 : index
    %3 = vector.load %arg3[%c0_3, %c0_4] : memref<1x128xf32, #tpu.memory_space<vmem>>, vector<1x128xf32>
    %4 = vector.broadcast %3 : vector<1x128xf32> to vector<8x128xf32>
    %5 = arith.addf %2, %4 : vector<8x128xf32>
    %cst_5 = arith.constant 0.000000e+00 : f32
    %6 = vector.broadcast %cst_5 : f32 to vector<8x128xf32>
    %7 = arith.maximumf %5, %6 : vector<8x128xf32>
    %c0_6 = arith.constant 0 : index
    %c0_7 = arith.constant 0 : index
    %8 = vector.load %arg4[%c0_6, %c0_7] : memref<128x4xf32, #tpu.memory_space<vmem>>, vector<128x4xf32>
    %cst_8 = arith.constant dense<0.000000e+00> : vector<8x4xf32>
    %9 = tpu.matmul %7, %8, %cst_8 {dimension_numbers = #tpu.dot_dimension_numbers<[1], [0], [0], [1], [0, 0, 1, 1], [], []>} : vector<8x128xf32>, vector<128x4xf32>, vector<8x4xf32> -> vector<8x4xf32>
    %c0_9 = arith.constant 0 : index
    %c0_10 = arith.constant 0 : index
    %10 = vector.load %arg5[%c0_9, %c0_10] : memref<1x4xf32, #tpu.memory_space<vmem>>, vector<1x4xf32>
    %11 = vector.broadcast %10 : vector<1x4xf32> to vector<8x4xf32>
    %12 = arith.addf %9, %11 : vector<8x4xf32>
    %cst_11 = arith.constant 0.000000e+00 : f32
    %13 = vector.broadcast %cst_11 : f32 to vector<8x4xf32>
    %14 = arith.subf %13, %12 : vector<8x4xf32>
    %15 = math.exp %14 : vector<8x4xf32>
    %cst_12 = arith.constant 1.000000e+00 : f32
    %16 = vector.broadcast %cst_12 : f32 to vector<8x4xf32>
    %17 = arith.addf %16, %15 : vector<8x4xf32>
    %18 = tpu.reciprocal %17 : vector<8x4xf32> -> vector<8x4xf32>
    %c0_13 = arith.constant 0 : index
    %c0_14 = arith.constant 0 : index
    %19 = vector.load %arg6[%c0_13, %c0_14] : memref<8x4xf32, #tpu.memory_space<vmem>>, vector<8x4xf32>
    tpu.vector_store %arg6[%c0_13, %c0_14], %18 {strides = array<i32>} : memref<8x4xf32, #tpu.memory_space<vmem>>, vector<8x4xf32>,
    return
  }
  func.func @transform_0(%arg0: i32) -> (i32, i32) {
    %c0_i32 = arith.constant 0 : i32
    %c0_i32_0 = arith.constant 0 : i32
    return %arg0, %c0_i32 : i32, i32
  }
  func.func @transform_1(%arg0: i32) -> (i32, i32) {
    %c0_i32 = arith.constant 0 : i32
    %c0_i32_0 = arith.constant 0 : i32
    %c0_i32_1 = arith.constant 0 : i32
    return %c0_i32, %c0_i32_0 : i32, i32
  }
  func.func @transform_2(%arg0: i32) -> (i32, i32) {
    %c0_i32 = arith.constant 0 : i32
    %c0_i32_0 = arith.constant 0 : i32
    %c0_i32_1 = arith.constant 0 : i32
    return %c0_i32, %c0_i32_0 : i32, i32
  }
  func.func @transform_3(%arg0: i32) -> (i32, i32) {
    %c0_i32 = arith.constant 0 : i32
    %c0_i32_0 = arith.constant 0 : i32
    %c0_i32_1 = arith.constant 0 : i32
    return %c0_i32, %c0_i32_0 : i32, i32
  }
  func.func @transform_4(%arg0: i32) -> (i32, i32) {
    %c0_i32 = arith.constant 0 : i32
    %c0_i32_0 = arith.constant 0 : i32
    %c0_i32_1 = arith.constant 0 : i32
    return %c0_i32, %c0_i32_0 : i32, i32
  }
  func.func @transform_5(%arg0: i32) -> (i32, i32) {
    %c0_i32 = arith.constant 0 : i32
    %c0_i32_0 = arith.constant 0 : i32
    return %arg0, %c0_i32 : i32, i32
  }
}

</mosaic_0001>

<llo_original>
// kernel: neuralnet_forward.1
$region0: #{neuralnet_forward.1}
  #allocation0 [shape = 'u32[]', space=smem, size = 0x4, offset = 0x4, fixed_abs, tag = 'smem constant byte address 0x4 - core index']
  #allocation1 [shape = 'u32[144,128]{1,0:T(1,128)}', space=vmem, size = 0x12000, scoped, tag = 'internal scratch']
  %s0 = inlined_call_operand.vmem [shape: f32[8,64], index: 0, kind: input, shape index: {}]
  %s1 = inlined_call_operand.vmem [shape: f32[64,128], index: 1, kind: input, shape index: {}]
  %s2 = inlined_call_operand.vmem [shape: f32[1,128], index: 2, kind: input, shape index: {}]
  %s3 = inlined_call_operand.vmem [shape: f32[128,4], index: 3, kind: input, shape index: {}]
  %s4 = inlined_call_operand.vmem [shape: f32[1,4], index: 4, kind: input, shape index: {}]
  %s5 = inlined_call_operand.vmem [shape: f32[8,4], index: 5, kind: output, shape index: {}]
  %s6 = sld [smem:[#allocation0]]
  $region30: #{neuralnet_forward.1} parent=0
    _
  %s8 = ssub.s32 1, %s6
  %s9 = scalar_select 0, %s8, %s6
  // Predicated region
  $region2: #{neuralnet_forward.1} parent=0 // pred_check
    _
  $region3: #{neuralnet_forward.1} parent=0 // pred_check_branch
    %11 = sbr.rel (0) target = $region5
  $region4: #{neuralnet_forward.1} parent=0 // pred_region
    _
  $region5: #{neuralnet_forward.1} parent=0 // pred_fallthru
    _
  // Predicated region
  $region6: #{neuralnet_forward.1} parent=0 // pred_check
    _
  $region7: #{neuralnet_forward.1} parent=0 // pred_check_branch
    %13 = sbr.rel (0) target = $region9
  $region8: #{neuralnet_forward.1} parent=0 // pred_region
    _
  $region9: #{neuralnet_forward.1} parent=0 // pred_fallthru
    _
  // Predicated region
  $region10: #{neuralnet_forward.1} parent=0 // pred_check
    _
  $region11: #{neuralnet_forward.1} parent=0 // pred_check_branch
    %15 = sbr.rel (0) target = $region13
  $region12: #{neuralnet_forward.1} parent=0 // pred_region
    _
  $region13: #{neuralnet_forward.1} parent=0 // pred_fallthru
    _
  // Predicated region
  $region14: #{neuralnet_forward.1} parent=0 // pred_check
    _
  $region15: #{neuralnet_forward.1} parent=0 // pred_check_branch
    %17 = sbr.rel (0) target = $region17
  $region16: #{neuralnet_forward.1} parent=0 // pred_region
    _
  $region17: #{neuralnet_forward.1} parent=0 // pred_fallthru
    _
  // Predicated region
  $region18: #{neuralnet_forward.1} parent=0 // pred_check
    _
  $region19: #{neuralnet_forward.1} parent=0 // pred_check_branch
    %19 = sbr.rel (0) target = $region21
  $region20: #{neuralnet_forward.1} parent=0 // pred_region
    _
  $region21: #{neuralnet_forward.1} parent=0 // pred_fallthru
    _
  %v20 = vld [vmem:[%s0] sm:$0xff]
  %v21 = vld [vmem:[%s1] sm:$0xff]
  %v22 = vld [vmem:[%s1 + $0x8] sm:$0xff]
  %v23 = vld [vmem:[%s1 + $0x10] sm:$0xff]
  %v24 = vld [vmem:[%s1 + $0x18] sm:$0xff]
  %v25 = vld [vmem:[%s1 + $0x20] sm:$0xff]
  %v26 = vld [vmem:[%s1 + $0x28] sm:$0xff]
  %v27 = vld [vmem:[%s1 + $0x30] sm:$0xff]
  %v28 = vld [vmem:[%s1 + $0x38] sm:$0xff]
  %v29 = vld [vmem:[%s2] sm:$0x1]
  %v31 = vlaneseq
  %v32 = vshrl.u32 %v31, 7
  %v33 = vsub.s32 0, %v32
  %v34 = vrot.slane %v29, %v33
  %vm36 = vcmask 523264
  %v38 = vsel %vm36, %v20, 0
  %40 = vmatprep.subr.mxu0 0.0
  %41 = vmatpush1.msra.mxu0 %v21
  %42 = vmatprep.subr.mxu0 0.0
  %43 = vmatpush1.msra.mxu0 %v22
  %44 = vmatprep.subr.mxu0 0.0
  %45 = vmatpush1.msra.mxu0 %v23
  %46 = vmatprep.subr.mxu0 0.0
  %47 = vmatpush1.msra.mxu0 %v24
  %48 = vmatprep.subr.mxu0 0.0
  %49 = vmatpush1.msra.mxu0 %v25
  %50 = vmatprep.subr.mxu0 0.0
  %51 = vmatpush1.msra.mxu0 %v26
  %52 = vmatprep.subr.mxu0 0.0
  %53 = vmatpush1.msra.mxu0 %v27
  %54 = vmatprep.subr.mxu0 0.0
  %55 = vmatpush1.msra.mxu0 %v28
  %56 = vmatprep.subr.mxu0 0.0
  %57 = vmatpush1.msra.mxu0 0.0
  %58 = vmatprep.subr.mxu0 0.0
  %59 = vmatpush1.msra.mxu0 0.0
  %60 = vmatprep.subr.mxu0 0.0
  %61 = vmatpush1.msra.mxu0 0.0
  %62 = vmatprep.subr.mxu0 0.0
  %63 = vmatpush1.msra.mxu0 0.0
  %64 = vmatprep.subr.mxu0 0.0
  %65 = vmatpush1.msra.mxu0 0.0
  %66 = vmatprep.subr.mxu0 0.0
  %67 = vmatpush1.msra.mxu0 0.0
  %68 = vmatprep.subr.mxu0 0.0
  %69 = vmatpush1.msra.mxu0 0.0
  %70 = vmatprep.subr.mxu0 0.0
  %71 = vmatpush1.msra.mxu0 0.0
  %72 = vmatprep.subr.mxu0 0.0
  %73 = vmatpush1.msra.mxu0 0.0
  %74 = vmatprep.subr.mxu0 0.0
  %75 = vmatpush1.msra.mxu0 0.0
  %76 = vmatprep.subr.mxu0 0.0
  %77 = vmatpush1.msra.mxu0 0.0
  %78 = vmatprep.subr.mxu0 0.0
  %79 = vmatpush1.msra.mxu0 0.0
  %80 = vmatprep.subr.mxu0 0.0
  %81 = vmatpush1.msra.mxu0 0.0
  %82 = vmatprep.subr.mxu0 0.0
  %83 = vmatpush1.msra.mxu0 0.0
  %84 = vmatprep.subr.mxu0 0.0
  %85 = vmatpush1.msra.mxu0 0.0
  %86 = vmatprep.subr.mxu0 0.0
  %87 = vmatpush1.msra.mxu0 0.0
  %88 = vmatprep.subr.mxu0 0.0
  %89 = vmatpush1.msra.mxu0 0.0
  %90 = vmatprep.subr.mxu0 0.0
  %91 = vmatpush1.msra.mxu0 0.0
  %92 = vmatprep.subr.mxu0 0.0
  %93 = vmatpush1.msra.mxu0 0.0
  %94 = vmatprep.subr.mxu0 0.0
  %95 = vmatpush1.msra.mxu0 0.0
  %96 = vmatprep.subr.mxu0 0.0
  %97 = vmatpush1.msra.mxu0 0.0
  %98 = vmatprep.subr.mxu0 0.0
  %99 = vmatpush1.msra.mxu0 0.0
  %100 = vmatprep.subr.mxu0 0.0
  %101 = vmatpush1.msra.mxu0 0.0
  %102 = vmatprep.subr.mxu0 0.0
  %103 = vmatpush1.msra.mxu0 0.0
  %104 = vmatprep.mubr.f32.mxu0 0.0
  %105 = vmatmul.mubr.f32.gmra.mrb[0].mxu0 %v38
  %v106 = vpop.f32.mrb[0].mxu0
  %v107 = vadd.f32 %v34, %v106
  %v108 = vpop.f32.mrb[0].mxu0
  %109 = vdwg.mxu0
  %v110 = vmax.f32 %v107, 0.0
  %v111 = vld [vmem:[%s3] sm:$0xff]
  %v112 = vld [vmem:[%s3 + $0x8] sm:$0xff]
  %v113 = vld [vmem:[%s3 + $0x10] sm:$0xff]
  %v114 = vld [vmem:[%s3 + $0x18] sm:$0xff]
  %v115 = vld [vmem:[%s3 + $0x20] sm:$0xff]
  %v116 = vld [vmem:[%s3 + $0x28] sm:$0xff]
  %v117 = vld [vmem:[%s3 + $0x30] sm:$0xff]
  %v118 = vld [vmem:[%s3 + $0x38] sm:$0xff]
  %v119 = vld [vmem:[%s3 + $0x40] sm:$0xff]
  %v120 = vld [vmem:[%s3 + $0x48] sm:$0xff]
  %v121 = vld [vmem:[%s3 + $0x50] sm:$0xff]
  %v122 = vld [vmem:[%s3 + $0x58] sm:$0xff]
  %v123 = vld [vmem:[%s3 + $0x60] sm:$0xff]
  %v124 = vld [vmem:[%s3 + $0x68] sm:$0xff]
  %v125 = vld [vmem:[%s3 + $0x70] sm:$0xff]
  %v126 = vld [vmem:[%s3 + $0x78] sm:$0xff]
  %v127 = vld [vmem:[%s4] sm:$0x1]
  %v129 = vlaneseq
  %v130 = vshrl.u32 %v129, 7
  %v131 = vsub.s32 0, %v130
  %v132 = vrot.slane %v127, %v131
  %134 = vmatprep.subr.mxu0 0.0
  %135 = vmatpush1.msra.mxu0 %v111
  %136 = vmatprep.subr.mxu0 0.0
  %137 = vmatpush1.msra.mxu0 %v112
  %138 = vmatprep.subr.mxu0 0.0
  %139 = vmatpush1.msra.mxu0 %v113
  %140 = vmatprep.subr.mxu0 0.0
  %141 = vmatpush1.msra.mxu0 %v114
  %142 = vmatprep.subr.mxu0 0.0
  %143 = vmatpush1.msra.mxu0 %v115
  %144 = vmatprep.subr.mxu0 0.0
  %145 = vmatpush1.msra.mxu0 %v116
  %146 = vmatprep.subr.mxu0 0.0
  %147 = vmatpush1.msra.mxu0 %v117
  %148 = vmatprep.subr.mxu0 0.0
  %149 = vmatpush1.msra.mxu0 %v118
  %150 = vmatprep.subr.mxu0 0.0
  %151 = vmatpush1.msra.mxu0 %v119
  %152 = vmatprep.subr.mxu0 0.0
  %153 = vmatpush1.msra.mxu0 %v120
  %154 = vmatprep.subr.mxu0 0.0
  %155 = vmatpush1.msra.mxu0 %v121
  %156 = vmatprep.subr.mxu0 0.0
  %157 = vmatpush1.msra.mxu0 %v122
  %158 = vmatprep.subr.mxu0 0.0
  %159 = vmatpush1.msra.mxu0 %v123
  %160 = vmatprep.subr.mxu0 0.0
  %161 = vmatpush1.msra.mxu0 %v124
  %162 = vmatprep.subr.mxu0 0.0
  %163 = vmatpush1.msra.mxu0 %v125
  %164 = vmatprep.subr.mxu0 0.0
  %165 = vmatpush1.msra.mxu0 %v126
  %166 = vmatprep.subr.mxu0 0.0
  %167 = vmatpush1.msra.mxu0 0.0
  %168 = vmatprep.subr.mxu0 0.0
  %169 = vmatpush1.msra.mxu0 0.0
  %170 = vmatprep.subr.mxu0 0.0
  %171 = vmatpush1.msra.mxu0 0.0
  %172 = vmatprep.subr.mxu0 0.0
  %173 = vmatpush1.msra.mxu0 0.0
  %174 = vmatprep.subr.mxu0 0.0
  %175 = vmatpush1.msra.mxu0 0.0
  %176 = vmatprep.subr.mxu0 0.0
  %177 = vmatpush1.msra.mxu0 0.0
  %178 = vmatprep.subr.mxu0 0.0
  %179 = vmatpush1.msra.mxu0 0.0
  %180 = vmatprep.subr.mxu0 0.0
  %181 = vmatpush1.msra.mxu0 0.0
  %182 = vmatprep.subr.mxu0 0.0
  %183 = vmatpush1.msra.mxu0 0.0
  %184 = vmatprep.subr.mxu0 0.0
  %185 = vmatpush1.msra.mxu0 0.0
  %186 = vmatprep.subr.mxu0 0.0
  %187 = vmatpush1.msra.mxu0 0.0
  %188 = vmatprep.subr.mxu0 0.0
  %189 = vmatpush1.msra.mxu0 0.0
  %190 = vmatprep.subr.mxu0 0.0
  %191 = vmatpush1.msra.mxu0 0.0
  %192 = vmatprep.subr.mxu0 0.0
  %193 = vmatpush1.msra.mxu0 0.0
  %194 = vmatprep.subr.mxu0 0.0
  %195 = vmatpush1.msra.mxu0 0.0
  %196 = vmatprep.subr.mxu0 0.0
  %197 = vmatpush1.msra.mxu0 0.0
  %198 = vmatprep.mubr.f32.mxu0 0.0
  %199 = vmatmul.mubr.f32.gmra.mrb[0].mxu0 %v110
  %v200 = vpop.f32.mrb[0].mxu0
  %v201 = vadd.f32 %v132, %v200
  %v202 = vpop.f32.mrb[0].mxu0
  %203 = vdwg.mxu0
  %v204 = vsub.f32 0.0, %v201
  %v205 = vmul.f32 %v204, 1.442695
  %v206 = vpow.pop %v205
  %v207 = vadd.f32 %v206, 1.0
  %v208 = vrcp.pop %v207
  %vm209 = vcmask 31744
  %210 = vst.msk [vmem:[%s5] sm:$0xff] %vm209, %v208
  // Predicated region
  $region22: #{neuralnet_forward.1} parent=0 // pred_check
    _
  $region23: #{neuralnet_forward.1} parent=0 // pred_check_branch
    %212 = sbr.rel (0) target = $region25
  $region24: #{neuralnet_forward.1} parent=0 // pred_region
    _
  $region25: #{neuralnet_forward.1} parent=0 // pred_fallthru
    _
  // Predicated region
  $region26: #{neuralnet_forward.1} parent=0 // pred_check
    _
  $region27: #{neuralnet_forward.1} parent=0 // pred_check_branch
    %214 = sbr.rel (0) target = $region29
  $region28: #{neuralnet_forward.1} parent=0 // pred_region
    _
  $region29: #{neuralnet_forward.1} parent=0 // pred_fallthru
    _

</llo_original>
